<compile_context>
chip_gen: v5e
topology: v5e:2x2
jax: 0.10.0
libtpu: 0.0.40
codegen_flags: <defaults>
</compile_context>

<pallas_src>
import math

import jax
import jax.numpy as jnp
from jax.experimental import pallas as pl
from jax.experimental.pallas import tpu as pltpu


# ---------------------------------------------------------------------------
# Tiling helpers
# ---------------------------------------------------------------------------
def _round_up(x, m):
    return ((x + m - 1) // m) * m


def _vmem_budget_bytes():
    """Generation-aware VMEM budget: ~half of physical VMEM, clamped to [32, 96] MiB."""
    cap = None
    try:
        cap = getattr(pltpu.get_tpu_info(), "vmem_capacity_bytes", None)
    except Exception:
        cap = None
    if not cap:
        cap = 64 * 1024 * 1024  # conservative fallback (v7x physical VMEM)
    return int(min(96 * 1024 * 1024, max(32 * 1024 * 1024, cap // 2)))


def _pick_tile_m(M, F, x_itemsize, out_itemsize, w_itemsize, vmem_budget,
                 *, min_steps=4, max_tile=2048):
    """Pick the M (=B*C) tile size.

    Constraints:
      * second-to-last block dim must be a multiple of 8 or the full extent,
      * at least `min_steps` grid steps when M allows it (both v7x TCs busy,
        DMA/compute pipelining exists),
      * double-buffered x/out/gate tiles plus single-buffered resident weights
        fit the VMEM budget (tiles >= 512 reach ~85% of HBM roofline on v6e).
    """
    if M <= 8:
        return M                                        # full extent -> always legal
    Fp = _round_up(F, 128)                              # lane padding in VMEM
    resident = 2 * F * Fp * w_itemsize + 2 * Fp * 4     # we, wa, be, ba (1 buffer each)
    per_row = 2 * (Fp * (x_itemsize + out_itemsize) + 128 * 4)  # x, out, gate (2 buffers)
    avail = max(vmem_budget - resident - (2 << 20), per_row * 8)
    fit = max(8, (avail // per_row) // 8 * 8)
    tile = min(max_tile, fit)
    # Force >= min_steps grid steps so the grid shards across TensorCores.
    tile = min(tile, max(8, _round_up(pl.cdiv(M, min_steps), 8)))
    # Prefer an exact divisor of M near the target to avoid a ragged last block.
    for cand in range(tile, max(7, tile // 2), -8):
        if M % cand == 0:
            return cand
    # Ragged last block is fine: rows are independent, OOB writeback is masked.
    return tile


# ---------------------------------------------------------------------------
# Kernel
# ---------------------------------------------------------------------------
def erase_add_kernel(x_ref, gate_ref, we_ref, be_ref, wa_ref, ba_ref, o_ref):
    # x_ref:    (TILE_M, F)  input rows (B*C collapsed), input dtype (f32/bf16)
    # gate_ref: (TILE_M, 1)  per-row gate weight column, f32
    # we_ref:   (F, F)       erase W^T (resident), input dtype
    # be_ref:   (1, F)       erase bias, f32
    # wa_ref:   (F, F)       add   W^T (resident), input dtype
    # ba_ref:   (1, F)       add   bias, f32
    # o_ref:    (TILE_M, F)
    x = x_ref[...]  # keep input dtype -> native bf16 MXU feed when x is bf16

    # Two (F, F) matmuls on the MXU; accumulate in f32.  Avoids the mid-vreg
    # column split a fused (F, 2F) logits slab would need when F < 128.
    erase_logits = jnp.dot(x, we_ref[...], preferred_element_type=jnp.float32) + be_ref[...]
    add_logits = jnp.dot(x, wa_ref[...], preferred_element_type=jnp.float32) + ba_ref[...]
    erase_gate = jax.nn.sigmoid(erase_logits)   # f32, EUP
    add_feat = jnp.tanh(add_logits)             # f32, EUP

    xf = x.astype(jnp.float32)                  # elementwise math in f32 (v5e: no bf16 VPU/EUP)
    w = jnp.broadcast_to(gate_ref[...], xf.shape)   # (TILE_M,1) -> (TILE_M,F), once per step

    # res = x - w*erase*x + w*add  ==  x + w*(add - erase*x)   (one fewer VALU mul)
    o_ref[...] = (xf + w * (add_feat - erase_gate * xf)).astype(o_ref.dtype)


# ---------------------------------------------------------------------------
# Wrappers
# ---------------------------------------------------------------------------
def prepare_erase_add_params(weight, w_erase, b_erase, w_add, b_add,
                             param_dtype=jnp.float32):
    """One-time parameter prep (hoisted out of the per-call path).

    weight:  [C]    per-concept gate weight (kept f32; streamed as an (M,1) column)
    w_erase: [F, F] PyTorch nn.Linear weight (out, in)   b_erase: [F]
    w_add:   [F, F]                                      b_add:   [F]

    `param_dtype=jnp.bfloat16` casts the Linear weights to bf16 (a documented
    deviation from the f32 PyTorch weights) to keep the MXU feed natively bf16.
    """
    F = w_erase.shape[0]
    return (
        weight.astype(jnp.float32),                 # (C,)
        w_erase.T.astype(param_dtype),              # (F, F)  erase W^T
        b_erase.reshape(1, F).astype(jnp.float32),  # (1, F)
        w_add.T.astype(param_dtype),                # (F, F)  add W^T
        b_add.reshape(1, F).astype(jnp.float32),    # (1, F)
    )


def erase_add_gate_prepared(x, weight, we_t, be, wa_t, ba):
    """x: [B, C, F]; params from prepare_erase_add_params. Returns [B, C, F] in x.dtype."""
    B, C, F = x.shape
    M = B * C
    x2 = x.reshape(M, F)
    # (M, 1) per-row gate column built from x's actual shape: M*4 HBM bytes,
    # nothing batch-size-dependent baked into the parameters.
    gate_col = jnp.broadcast_to(weight.astype(jnp.float32)[None, :], (B, C)).reshape(M, 1)

    vmem_budget = _vmem_budget_bytes()
    tile_m = _pick_tile_m(M, F, x2.dtype.itemsize, x2.dtype.itemsize,
                          we_t.dtype.itemsize, vmem_budget)
    grid = (pl.cdiv(M, tile_m),)

    # Resident (constant index_map) weights/biases: single-buffered.
    def resident(shape):
        return pl.BlockSpec(shape, lambda i: (0, 0), pipeline_mode=pl.Buffered(1))

    grid_spec = pltpu.PrefetchScalarGridSpec(
        num_scalar_prefetch=0,
        grid=grid,
        in_specs=[
            pl.BlockSpec((tile_m, F), lambda i: (i, 0)),   # x rows (streamed)
            pl.BlockSpec((tile_m, 1), lambda i: (i, 0)),   # gate column (streamed, tiny)
            resident((F, F)),                              # erase W^T
            resident((1, F)),                              # erase bias
            resident((F, F)),                              # add   W^T
            resident((1, F)),                              # add   bias
        ],
        out_specs=pl.BlockSpec((tile_m, F), lambda i: (i, 0)),
    )

    out2 = pl.pallas_call(
        erase_add_kernel,
        out_shape=jax.ShapeDtypeStruct((M, F), x.dtype),
        grid_spec=grid_spec,
        compiler_params=pltpu.CompilerParams(
            dimension_semantics=("parallel",),   # shard M tiles across v7x's 2 TCs
            vmem_limit_bytes=vmem_budget,
        ),
    )(x2, gate_col, we_t, be, wa_t, ba)
    return out2.reshape(B, C, F)


def erase_add_gate(x, weight, w_erase, b_erase, w_add, b_add, *, compute_dtype=None):
    """One-shot convenience API (prep + call).

    `compute_dtype=jnp.bfloat16` casts x / weights / output at the pallas_call
    boundary: ~2x less HBM traffic on the dominant x+out streams with identical
    MXU accuracy (f32 accumulation).  Default keeps x.dtype and matching
    parameter dtype, mirroring the PyTorch module.  Inside training loops,
    prefer prepare_erase_add_params() + erase_add_gate_prepared() so the
    parameter prep is amortized.
    """
    if compute_dtype is not None:
        x = x.astype(compute_dtype)
        param_dtype = compute_dtype
    else:
        param_dtype = x.dtype
    params = prepare_erase_add_params(weight, w_erase, b_erase, w_add, b_add,
                                      param_dtype=param_dtype)
    return erase_add_gate_prepared(x, *params)


# ---------------------------------------------------------------------------
# Pure-JAX reference (mirrors the PyTorch forward exactly)
# ---------------------------------------------------------------------------
def erase_add_gate_ref(x, weight, w_erase, b_erase, w_add, b_add):
    erase_gate = jax.nn.sigmoid(jnp.einsum("bcf,gf->bcg", x, w_erase) + b_erase)
    tmp_x = x - weight[:, None] * erase_gate * x
    add_feat = jnp.tanh(jnp.einsum("bcf,gf->bcg", x, w_add) + b_add)
    return tmp_x + weight[:, None] * add_feat


# ---------------------------------------------------------------------------
# Self-test
# ---------------------------------------------------------------------------
if __name__ == "__main__":
    batch_size = 2
    concept_num = 8
    feature_dim = 32   # NOTE: production F >= 128 makes every streamed block lane-dense

    key = jax.random.PRNGKey(0)
    kx, kw, kwe, kbe, kwa, kba = jax.random.split(key, 6)

    stdv_w = 1.0 / math.sqrt(concept_num)
    weight = jax.random.uniform(kw, (concept_num,), jnp.float32, -stdv_w, stdv_w)

    stdv_lin = 1.0 / math.sqrt(feature_dim)  # PyTorch nn.Linear default init range
    w_erase = jax.random.uniform(kwe, (feature_dim, feature_dim), jnp.float32, -stdv_lin, stdv_lin)
    b_erase = jax.random.uniform(kbe, (feature_dim,), jnp.float32, -stdv_lin, stdv_lin)
    w_add = jax.random.uniform(kwa, (feature_dim, feature_dim), jnp.float32, -stdv_lin, stdv_lin)
    b_add = jax.random.uniform(kba, (feature_dim,), jnp.float32, -stdv_lin, stdv_lin)

    x = jax.random.normal(kx, (batch_size, concept_num, feature_dim), jnp.float32)
    ref = erase_add_gate_ref(x, weight, w_erase, b_erase, w_add, b_add)

    # --- f32 path: prep once, jit the prepared call (param prep hoisted) ----
    params_f32 = prepare_erase_add_params(weight, w_erase, b_erase, w_add, b_add,
                                          param_dtype=jnp.float32)
    fwd = jax.jit(erase_add_gate_prepared)
    out = jax.block_until_ready(fwd(x, *params_f32))
    assert out.shape == (batch_size, concept_num, feature_dim)
    assert jnp.allclose(out, ref, atol=1e-5, rtol=1e-5), "f32 mismatch vs reference"

    # --- bf16 path: halve x/out HBM streams, native bf16 MXU feed, f32 acc --
    out_bf16 = jax.block_until_ready(
        erase_add_gate(x, weight, w_erase, b_erase, w_add, b_add,
                       compute_dtype=jnp.bfloat16))
    assert out_bf16.dtype == jnp.bfloat16
    assert jnp.allclose(out_bf16.astype(jnp.float32), ref, atol=5e-2, rtol=5e-2), \
        "bf16 mismatch vs reference"

    print("KERNEL_OK")
</pallas_src>

<mosaic_0001>
module attributes {stable_mosaic.version = 11 : i64} {
  func.func @erase_add_kernel(%arg0: i32, %arg1: memref<8x32xf32, #tpu.memory_space<vmem>>, %arg2: memref<8x1xf32, #tpu.memory_space<vmem>>, %arg3: memref<32x32xf32, #tpu.memory_space<vmem>>, %arg4: memref<1x32xf32, #tpu.memory_space<vmem>>, %arg5: memref<32x32xf32, #tpu.memory_space<vmem>>, %arg6: memref<1x32xf32, #tpu.memory_space<vmem>>, %arg7: memref<8x32xf32, #tpu.memory_space<vmem>>) attributes {dimension_semantics = [#tpu.dimension_semantics<parallel>], iteration_bounds = array<i64: 2>, scalar_prefetch = 0 : i64, scratch_operands = 0 : i64, tpu.core_type = #tpu.core_type<tc>, window_params = [{transform_indices = @transform_0, window_bounds = array<i64: 8, 32>}, {transform_indices = @transform_1, window_bounds = array<i64: 8, 1>}, {pipeline_mode = #tpu.pipeline_mode<synchronous>, transform_indices = @transform_2, window_bounds = array<i64: 32, 32>}, {pipeline_mode = #tpu.pipeline_mode<synchronous>, transform_indices = @transform_3, window_bounds = array<i64: 1, 32>}, {pipeline_mode = #tpu.pipeline_mode<synchronous>, transform_indices = @transform_4, window_bounds = array<i64: 32, 32>}, {pipeline_mode = #tpu.pipeline_mode<synchronous>, transform_indices = @transform_5, window_bounds = array<i64: 1, 32>}, {transform_indices = @transform_6, window_bounds = array<i64: 8, 32>}]} {
    %c0 = arith.constant 0 : index
    %c0_0 = arith.constant 0 : index
    %0 = vector.load %arg1[%c0, %c0_0] : memref<8x32xf32, #tpu.memory_space<vmem>>, vector<8x32xf32>
    %c0_1 = arith.constant 0 : index
    %c0_2 = arith.constant 0 : index
    %1 = vector.load %arg3[%c0_1, %c0_2] : memref<32x32xf32, #tpu.memory_space<vmem>>, vector<32x32xf32>
    %cst = arith.constant dense<0.000000e+00> : vector<8x32xf32>
    %2 = tpu.matmul %0, %1, %cst {dimension_numbers = #tpu.dot_dimension_numbers<[1], [0], [0], [1], [0, 0, 1, 1], [], []>} : vector<8x32xf32>, vector<32x32xf32>, vector<8x32xf32> -> vector<8x32xf32>
    %c0_3 = arith.constant 0 : index
    %c0_4 = arith.constant 0 : index
    %3 = vector.load %arg4[%c0_3, %c0_4] : memref<1x32xf32, #tpu.memory_space<vmem>>, vector<1x32xf32>
    %4 = vector.broadcast %3 : vector<1x32xf32> to vector<8x32xf32>
    %5 = arith.addf %2, %4 : vector<8x32xf32>
    %c0_5 = arith.constant 0 : index
    %c0_6 = arith.constant 0 : index
    %6 = vector.load %arg5[%c0_5, %c0_6] : memref<32x32xf32, #tpu.memory_space<vmem>>, vector<32x32xf32>
    %cst_7 = arith.constant dense<0.000000e+00> : vector<8x32xf32>
    %7 = tpu.matmul %0, %6, %cst_7 {dimension_numbers = #tpu.dot_dimension_numbers<[1], [0], [0], [1], [0, 0, 1, 1], [], []>} : vector<8x32xf32>, vector<32x32xf32>, vector<8x32xf32> -> vector<8x32xf32>
    %c0_8 = arith.constant 0 : index
    %c0_9 = arith.constant 0 : index
    %8 = vector.load %arg6[%c0_8, %c0_9] : memref<1x32xf32, #tpu.memory_space<vmem>>, vector<1x32xf32>
    %9 = vector.broadcast %8 : vector<1x32xf32> to vector<8x32xf32>
    %10 = arith.addf %7, %9 : vector<8x32xf32>
    %11 = arith.negf %5 : vector<8x32xf32>
    %12 = math.exp %11 : vector<8x32xf32>
    %cst_10 = arith.constant 1.000000e+00 : f32
    %13 = vector.broadcast %cst_10 : f32 to vector<8x32xf32>
    %14 = arith.addf %13, %12 : vector<8x32xf32>
    %15 = arith.divf %13, %14 : vector<8x32xf32>
    %16 = math.tanh %10 : vector<8x32xf32>
    %c0_11 = arith.constant 0 : index
    %c0_12 = arith.constant 0 : index
    %17 = vector.load %arg2[%c0_11, %c0_12] : memref<8x1xf32, #tpu.memory_space<vmem>>, vector<8x1xf32>
    %18 = vector.shape_cast %17 : vector<8x1xf32> to vector<8x1xf32>
    %19 = vector.broadcast %18 : vector<8x1xf32> to vector<8x32xf32>
    %20 = arith.mulf %15, %0 : vector<8x32xf32>
    %21 = arith.subf %16, %20 : vector<8x32xf32>
    %22 = arith.mulf %19, %21 : vector<8x32xf32>
    %23 = arith.addf %0, %22 : vector<8x32xf32>
    %c0_13 = arith.constant 0 : index
    %c0_14 = arith.constant 0 : index
    %24 = vector.load %arg7[%c0_13, %c0_14] : memref<8x32xf32, #tpu.memory_space<vmem>>, vector<8x32xf32>
    tpu.vector_store %arg7[%c0_13, %c0_14], %23 {strides = array<i32>} : memref<8x32xf32, #tpu.memory_space<vmem>>, vector<8x32xf32>,
    return
  }
  func.func @transform_0(%arg0: i32) -> (i32, i32) {
    %c0_i32 = arith.constant 0 : i32
    %c0_i32_0 = arith.constant 0 : i32
    return %arg0, %c0_i32 : i32, i32
  }
  func.func @transform_1(%arg0: i32) -> (i32, i32) {
    %c0_i32 = arith.constant 0 : i32
    %c0_i32_0 = arith.constant 0 : i32
    return %arg0, %c0_i32 : i32, i32
  }
  func.func @transform_2(%arg0: i32) -> (i32, i32) {
    %c0_i32 = arith.constant 0 : i32
    %c0_i32_0 = arith.constant 0 : i32
    %c0_i32_1 = arith.constant 0 : i32
    return %c0_i32, %c0_i32_0 : i32, i32
  }
  func.func @transform_3(%arg0: i32) -> (i32, i32) {
    %c0_i32 = arith.constant 0 : i32
    %c0_i32_0 = arith.constant 0 : i32
    %c0_i32_1 = arith.constant 0 : i32
    return %c0_i32, %c0_i32_0 : i32, i32
  }
  func.func @transform_4(%arg0: i32) -> (i32, i32) {
    %c0_i32 = arith.constant 0 : i32
    %c0_i32_0 = arith.constant 0 : i32
    %c0_i32_1 = arith.constant 0 : i32
    return %c0_i32, %c0_i32_0 : i32, i32
  }
  func.func @transform_5(%arg0: i32) -> (i32, i32) {
    %c0_i32 = arith.constant 0 : i32
    %c0_i32_0 = arith.constant 0 : i32
    %c0_i32_1 = arith.constant 0 : i32
    return %c0_i32, %c0_i32_0 : i32, i32
  }
  func.func @transform_6(%arg0: i32) -> (i32, i32) {
    %c0_i32 = arith.constant 0 : i32
    %c0_i32_0 = arith.constant 0 : i32
    return %arg0, %c0_i32 : i32, i32
  }
}

</mosaic_0001>

<llo_original>
// kernel: erase_add_gate_prepared.1
$region0: #{erase_add_gate_prepared.1}
  #allocation0 [shape = 'u32[]', space=smem, size = 0x4, offset = 0x4, fixed_abs, tag = 'smem constant byte address 0x4 - core index']
  #allocation1 [shape = 'u32[72,128]{1,0:T(1,128)}', space=vmem, size = 0x9000, scoped, tag = 'internal scratch']
  %s0 = inlined_call_operand.vmem [shape: f32[16,32], index: 0, kind: input, shape index: {}]
  %s1 = inlined_call_operand.vmem [shape: f32[16,1], index: 1, kind: input, shape index: {}]
  %s2 = inlined_call_operand.hbm [shape: f32[32,32], index: 2, kind: input, shape index: {}]
  %s3 = inlined_call_operand.vmem [shape: f32[1,32], index: 3, kind: input, shape index: {}]
  %s4 = inlined_call_operand.hbm [shape: f32[32,32], index: 4, kind: input, shape index: {}]
  %s5 = inlined_call_operand.vmem [shape: f32[1,32], index: 5, kind: input, shape index: {}]
  %s6 = inlined_call_operand.hbm [shape: f32[16,32], index: 6, kind: output, shape index: {}]
  %s7 = sld [smem:[#allocation0]]
  $region65: #{erase_add_gate_prepared.1} parent=0
    _
  %s9 = ssub.s32 1, %s7
  %s10 = scalar_select 0, %s9, %s7
  $region1: #{erase_add_gate_prepared.1} parent=0
    #allocation2 [shape = 'u8[16384]{0}', space=vmem, size = 0x4000, scoped, tag = 'input window, operand 2, single buffered']
    #allocation3 [shape = 's32[2]{0}', space=sflag, size = 0x8, scoped, tag = 'scoped memory for erase_add_gate_prepared.1']
    #allocation4 [shape = 's32[2]{0}', space=sflag, size = 0x8, scoped, tag = 'scoped memory for erase_add_gate_prepared.1']
    #allocation5 [shape = 'u8[16384]{0}', space=vmem, size = 0x4000, scoped, tag = 'input window, operand 4, single buffered']
    #allocation6 [shape = 's32[1]{0}', space=sflag, size = 0x4, scoped, tag = 'scoped memory for erase_add_gate_prepared.1']
    #allocation7 [shape = 'u8[8192]{0}', space=vmem, size = 0x2000, scoped, tag = 'output window, operand 0']
    %11 = vsyncpa [#allocation3], 0
    %12 = vsyncpa [#allocation6], 0
    %13 = vsyncpa [#allocation4], 0
    %s14 = scalar_lea.sflag [#allocation4], 1
    %15 = vsyncpa %s14, 0
    loop: start=0, step=1, limit=4
    $region2: #{erase_add_gate_prepared.1} parent=1 // loop_pre_header
      _
    $region3: #{erase_add_gate_prepared.1} parent=1 // loop_header
      %s17 = sphi 0, %s21
      %p18 = scmp.ge.s32.totalorder %s17, 4
      %s27 = sphi 0, %s29
      %s30 = sphi 0, %s27
      %s31 = sphi 0, %s30
      %s47 = sphi 0, %s31
      %s53 = sphi 0, %s55
      %s56 = sphi 0, %s53
      %s57 = sphi 0, %s56
      %s73 = sphi 0, %s57
      %s77 = sphi 0, %s77
      %s79 = sphi 0, %s77
      %s80 = sphi 0, %s79
      %s94 = sphi 0, %s80
      %s98 = sphi 0, %s98
      %s100 = sphi 0, %s98
      %s101 = sphi 0, %s100
      %s115 = sphi 0, %s101
      %s119 = sphi 0, %s119
      %s121 = sphi 0, %s119
      %s122 = sphi 0, %s121
      %s136 = sphi 0, %s122
      %s140 = sphi 0, %s140
      %s142 = sphi 0, %s140
      %s143 = sphi 0, %s142
      %s157 = sphi 0, %s143
      %s163 = sphi 0, %s165
      %s166 = sphi 0, %s163
      %s167 = sphi 0, %s166
      %s183 = sphi 0, %s167
    $region4: #{erase_add_gate_prepared.1} parent=1 // loop_header_branch
      %20 = sbr.rel (%p18) target = $region8
    $region5: #{erase_add_gate_prepared.1} parent=1 // loop_body
      %s22 = ssub.s32 %s17, 1
      %s23 = ssub.s32 %s17, 2
      %s24 = sadd.s32 %s17, 1
      %s25 = ssub.s32 %s17, %s24
      %p26 = scmp.eq.s32.totalorder %s25, 0
      %s28 = sadd.s32 %s27, 1
      %s29 = scalar_select %p26, %s27, %s28
      %p32 = pneg %p26
      %p33 = scmp.eq.s32.totalorder %s17, 1
      %p34 = por %p32, %p33
      %p35 = scmp.ne.s32.totalorder %s27, %s30
      %p36 = scmp.eq.s32.totalorder %s17, 0
      %p37 = por %p35, %p36
      %p38 = scmp.ne.s32.totalorder %s27, %s30
      %p39 = scmp.eq.s32.totalorder %s22, 1
      %p40 = por %p38, %p39
      %p41 = scmp.ne.s32.totalorder %s30, %s31
      %p42 = scmp.eq.s32.totalorder %s22, 0
      %p43 = por %p41, %p42
      %p44 = scmp.ne.s32.totalorder %s30, %s31
      %p45 = scmp.eq.s32.totalorder %s23, 1
      %p46 = por %p44, %p45
      %p48 = scmp.ne.s32.totalorder %s31, %s47
      %p49 = scmp.eq.s32.totalorder %s23, 0
      %p50 = por %p48, %p49
      %s51 = ssub.s32 %s17, %s24
      %p52 = scmp.eq.s32.totalorder %s51, 0
      %s54 = sadd.s32 %s53, 1
      %s55 = scalar_select %p52, %s53, %s54
      %p58 = pneg %p52
      %p59 = scmp.eq.s32.totalorder %s17, 1
      %p60 = por %p58, %p59
      %p61 = scmp.ne.s32.totalorder %s53, %s56
      %p62 = scmp.eq.s32.totalorder %s17, 0
      %p63 = por %p61, %p62
      %p64 = scmp.ne.s32.totalorder %s53, %s56
      %p65 = scmp.eq.s32.totalorder %s22, 1
      %p66 = por %p64, %p65
      %p67 = scmp.ne.s32.totalorder %s56, %s57
      %p68 = scmp.eq.s32.totalorder %s22, 0
      %p69 = por %p67, %p68
      %p70 = scmp.ne.s32.totalorder %s56, %s57
      %p71 = scmp.eq.s32.totalorder %s23, 1
      %p72 = por %p70, %p71
      %p74 = scmp.ne.s32.totalorder %s57, %s73
      %p75 = scmp.eq.s32.totalorder %s23, 0
      %p76 = por %p74, %p75
      %s78 = sadd.s32 %s77, 1
      %p81 = scmp.eq.s32.totalorder %s17, 1
      %p82 = scmp.ne.s32.totalorder %s77, %s79
      %p83 = scmp.eq.s32.totalorder %s17, 0
      %p84 = por %p82, %p83
      %p85 = scmp.ne.s32.totalorder %s77, %s79
      %p86 = scmp.eq.s32.totalorder %s22, 1
      %p87 = por %p85, %p86
      %p88 = scmp.ne.s32.totalorder %s79, %s80
      %p89 = scmp.eq.s32.totalorder %s22, 0
      %p90 = por %p88, %p89
      %p91 = scmp.ne.s32.totalorder %s79, %s80
      %p92 = scmp.eq.s32.totalorder %s23, 1
      %p93 = por %p91, %p92
      %p95 = scmp.ne.s32.totalorder %s80, %s94
      %p96 = scmp.eq.s32.totalorder %s23, 0
      %p97 = por %p95, %p96
      %s99 = sadd.s32 %s98, 1
      %p102 = scmp.eq.s32.totalorder %s17, 1
      %p103 = scmp.ne.s32.totalorder %s98, %s100
      %p104 = scmp.eq.s32.totalorder %s17, 0
      %p105 = por %p103, %p104
      %p106 = scmp.ne.s32.totalorder %s98, %s100
      %p107 = scmp.eq.s32.totalorder %s22, 1
      %p108 = por %p106, %p107
      %p109 = scmp.ne.s32.totalorder %s100, %s101
      %p110 = scmp.eq.s32.totalorder %s22, 0
      %p111 = por %p109, %p110
      %p112 = scmp.ne.s32.totalorder %s100, %s101
      %p113 = scmp.eq.s32.totalorder %s23, 1
      %p114 = por %p112, %p113
      %p116 = scmp.ne.s32.totalorder %s101, %s115
      %p117 = scmp.eq.s32.totalorder %s23, 0
      %p118 = por %p116, %p117
      %s120 = sadd.s32 %s119, 1
      %p123 = scmp.eq.s32.totalorder %s17, 1
      %p124 = scmp.ne.s32.totalorder %s119, %s121
      %p125 = scmp.eq.s32.totalorder %s17, 0
      %p126 = por %p124, %p125
      %p127 = scmp.ne.s32.totalorder %s119, %s121
      %p128 = scmp.eq.s32.totalorder %s22, 1
      %p129 = por %p127, %p128
      %p130 = scmp.ne.s32.totalorder %s121, %s122
      %p131 = scmp.eq.s32.totalorder %s22, 0
      %p132 = por %p130, %p131
      %p133 = scmp.ne.s32.totalorder %s121, %s122
      %p134 = scmp.eq.s32.totalorder %s23, 1
      %p135 = por %p133, %p134
      %p137 = scmp.ne.s32.totalorder %s122, %s136
      %p138 = scmp.eq.s32.totalorder %s23, 0
      %p139 = por %p137, %p138
      %s141 = sadd.s32 %s140, 1
      %p144 = scmp.eq.s32.totalorder %s17, 1
      %p145 = scmp.ne.s32.totalorder %s140, %s142
      %p146 = scmp.eq.s32.totalorder %s17, 0
      %p147 = por %p145, %p146
      %p148 = scmp.ne.s32.totalorder %s140, %s142
      %p149 = scmp.eq.s32.totalorder %s22, 1
      %p150 = por %p148, %p149
      %p151 = scmp.ne.s32.totalorder %s142, %s143
      %p152 = scmp.eq.s32.totalorder %s22, 0
      %p153 = por %p151, %p152
      %p154 = scmp.ne.s32.totalorder %s142, %s143
      %p155 = scmp.eq.s32.totalorder %s23, 1
      %p156 = por %p154, %p155
      %p158 = scmp.ne.s32.totalorder %s143, %s157
      %p159 = scmp.eq.s32.totalorder %s23, 0
      %p160 = por %p158, %p159
      %s161 = ssub.s32 %s17, %s24
      %p162 = scmp.eq.s32.totalorder %s161, 0
      %s164 = sadd.s32 %s163, 1
      %s165 = scalar_select %p162, %s163, %s164
      %p168 = pneg %p162
      %p169 = scmp.eq.s32.totalorder %s17, 1
      %p170 = por %p168, %p169
      %p171 = scmp.ne.s32.totalorder %s163, %s166
      %p172 = scmp.eq.s32.totalorder %s17, 0
      %p173 = por %p171, %p172
      %p174 = scmp.ne.s32.totalorder %s163, %s166
      %p175 = scmp.eq.s32.totalorder %s22, 1
      %p176 = por %p174, %p175
      %p177 = scmp.ne.s32.totalorder %s166, %s167
      %p178 = scmp.eq.s32.totalorder %s22, 0
      %p179 = por %p177, %p178
      %p180 = scmp.ne.s32.totalorder %s166, %s167
      %p181 = scmp.eq.s32.totalorder %s23, 1
      %p182 = por %p180, %p181
      %p184 = scmp.ne.s32.totalorder %s167, %s183
      %p185 = scmp.eq.s32.totalorder %s23, 0
      %p186 = por %p184, %p185
      %p187 = scmp.le.s32.totalorder 1, %s17
      %p188 = scmp.lt.s32.totalorder %s17, 3
      %p189 = pnand %p187, %p188
      %p190 = pneg %p189
      // Predicated region
      $region9: #{erase_add_gate_prepared.1} parent=5 // pred_check
        _
      $region10: #{erase_add_gate_prepared.1} parent=5 // pred_check_branch
        %192 = sbr.rel (%p189) target = $region12
      $region11: #{erase_add_gate_prepared.1} parent=5 // pred_region
        %s193 = ssub.s32 %s17, 1
        // Predicated region
        $region13: #{erase_add_gate_prepared.1} parent=11 // pred_check
          %p194 = pneg %p90
        $region14: #{erase_add_gate_prepared.1} parent=11 // pred_check_branch
          %196 = sbr.rel (%p194) target = $region16
        $region15: #{erase_add_gate_prepared.1} parent=11 // pred_region
          %198 = vsyncadd [#allocation3], 0
          %s199 = sshll.u32 %s2, 4
          %s200 = int_to_ptr.hbm [resolvable:$true] %s199
          %s201 = sshll.u32 [#allocation2], 4
          %s202 = int_to_ptr.vmem [resolvable:$true] %s201
          %207 = dma.hbm_to_vmem [thread:$0]  %s200, 512, %s202, [#allocation3], 128, 128, 8
        $region16: #{erase_add_gate_prepared.1} parent=11 // pred_fallthru
          _
        // Predicated region
        $region17: #{erase_add_gate_prepared.1} parent=11 // pred_check
          %p208 = pneg %p111
        $region18: #{erase_add_gate_prepared.1} parent=11 // pred_check_branch
          %210 = sbr.rel (%p208) target = $region20
        $region19: #{erase_add_gate_prepared.1} parent=11 // pred_region
          _
        $region20: #{erase_add_gate_prepared.1} parent=11 // pred_fallthru
          _
        // Predicated region
        $region21: #{erase_add_gate_prepared.1} parent=11 // pred_check
          %p211 = pneg %p132
        $region22: #{erase_add_gate_prepared.1} parent=11 // pred_check_branch
          %213 = sbr.rel (%p211) target = $region24
        $region23: #{erase_add_gate_prepared.1} parent=11 // pred_region
          %215 = vsyncadd [#allocation6], 0
          %s216 = sshll.u32 %s4, 4
          %s217 = int_to_ptr.hbm [resolvable:$true] %s216
          %s218 = sshll.u32 [#allocation5], 4
          %s219 = int_to_ptr.vmem [resolvable:$true] %s218
          %224 = dma.hbm_to_vmem [thread:$0]  %s217, 512, %s219, [#allocation6], 128, 128, 8
        $region24: #{erase_add_gate_prepared.1} parent=11 // pred_fallthru
          _
        // Predicated region
        $region25: #{erase_add_gate_prepared.1} parent=11 // pred_check
          %p225 = pneg %p153
        $region26: #{erase_add_gate_prepared.1} parent=11 // pred_check_branch
          %227 = sbr.rel (%p225) target = $region28
        $region27: #{erase_add_gate_prepared.1} parent=11 // pred_region
          _
        $region28: #{erase_add_gate_prepared.1} parent=11 // pred_fallthru
          _
      $region12: #{erase_add_gate_prepared.1} parent=5 // pred_fallthru
        _
      %p228 = scmp.lt.s32.totalorder %s17, 2
      // Predicated region
      $region29: #{erase_add_gate_prepared.1} parent=5 // pred_check
        %p229 = pneg %p228
      $region30: #{erase_add_gate_prepared.1} parent=5 // pred_check_branch
        %231 = sbr.rel (%p229) target = $region32
      $region31: #{erase_add_gate_prepared.1} parent=5 // pred_region
        // Predicated region
        $region33: #{erase_add_gate_prepared.1} parent=31 // pred_check
          %p232 = pneg %p37
        $region34: #{erase_add_gate_prepared.1} parent=31 // pred_check_branch
          %234 = sbr.rel (%p232) target = $region36
        $region35: #{erase_add_gate_prepared.1} parent=31 // pred_region
          %p235 = scmp.lt.s32.totalorder %s17, 1
          %s236 = scalar_select %p235, %s17, 1
          %s237 = smul.addr %s236, 8
          %s238 = scalar_lea.vmem %s0, %s237
        $region36: #{erase_add_gate_prepared.1} parent=31 // pred_fallthru
          _
        // Predicated region
        $region37: #{erase_add_gate_prepared.1} parent=31 // pred_check
          %p239 = pneg %p63
        $region38: #{erase_add_gate_prepared.1} parent=31 // pred_check_branch
          %241 = sbr.rel (%p239) target = $region40
        $region39: #{erase_add_gate_prepared.1} parent=31 // pred_region
          %p242 = scmp.lt.s32.totalorder %s17, 1
          %s243 = scalar_select %p242, %s17, 1
          %s244 = smul.addr %s243, 8
          %s245 = scalar_lea.vmem %s1, %s244
        $region40: #{erase_add_gate_prepared.1} parent=31 // pred_fallthru
          _
      $region32: #{erase_add_gate_prepared.1} parent=5 // pred_fallthru
        _
      %p246 = scmp.le.s32.totalorder 1, %s17
      %p247 = scmp.lt.s32.totalorder %s17, 3
      %p248 = pnand %p246, %p247
      %p249 = pneg %p248
      // Predicated region
      $region41: #{erase_add_gate_prepared.1} parent=5 // pred_check
        _
      $region42: #{erase_add_gate_prepared.1} parent=5 // pred_check_branch
        %251 = sbr.rel (%p248) target = $region44
      $region43: #{erase_add_gate_prepared.1} parent=5 // pred_region
        %s252 = ssub.s32 %s17, 1
        // Predicated region
        $region45: #{erase_add_gate_prepared.1} parent=43 // pred_check
          %p253 = pneg %p90
        $region46: #{erase_add_gate_prepared.1} parent=43 // pred_check_branch
          %255 = sbr.rel (%p253) target = $region48
        $region47: #{erase_add_gate_prepared.1} parent=43 // pred_region
          %257 = dma.done [#allocation3], 512
        $region48: #{erase_add_gate_prepared.1} parent=43 // pred_fallthru
          _
        // Predicated region
        $region49: #{erase_add_gate_prepared.1} parent=43 // pred_check
          %p258 = pneg %p132
        $region50: #{erase_add_gate_prepared.1} parent=43 // pred_check_branch
          %260 = sbr.rel (%p258) target = $region52
        $region51: #{erase_add_gate_prepared.1} parent=43 // pred_region
          %262 = dma.done [#allocation6], 512
        $region52: #{erase_add_gate_prepared.1} parent=43 // pred_fallthru
          _
        %p263 = scmp.lt.s32.totalorder %s22, 1
        %s264 = scalar_select %p263, %s22, 1
        %s265 = smul.addr %s264, 8
        %s266 = scalar_lea.vmem %s0, %s265
        %p267 = pneg %p43
        %p268 = pneg %p40
        %p269 = scmp.lt.s32.totalorder %s22, 1
        %s270 = scalar_select %p269, %s22, 1
        %s271 = smul.addr %s270, 8
        %s272 = scalar_lea.vmem %s1, %s271
        %p273 = pneg %p69
        %p274 = pneg %p66
        %p275 = pneg %p90
        %p276 = pneg %p87
        %p277 = pneg %p111
        %p278 = pneg %p108
        %p279 = pneg %p132
        %p280 = pneg %p129
        %p281 = pneg %p153
        %p282 = pneg %p150
        %p283 = pneg %p179
        %p284 = pneg %p176
        %s285 = sand.u32 %s166, 1
        %s286 = scalar_lea.sflag [#allocation4], %s285
        %s287 = sand.u32 %s166, 1
        %s288 = smul.addr %s287, 8
        %s289 = scalar_lea.vmem [#allocation7], %s288
        %p290 = scmp.lt.s32.totalorder %s22, 1
        %s291 = scalar_select %p290, %s22, 1
        %s292 = smul.addr %s291, 8
        %s293 = scalar_lea.vmem %s0, %s292
        %p294 = scmp.lt.s32.totalorder %s22, 1
        %s295 = scalar_select %p294, %s22, 1
        %s296 = smul.addr %s295, 8
        %s297 = scalar_lea.vmem %s1, %s296
        %v298 = vld [vmem:[%s293] sm:$0xff]
        %v299 = vld [vmem:[#allocation2] sm:$0xff]
        %v300 = vld [vmem:[#allocation2 + $0x8] sm:$0xff]
        %v301 = vld [vmem:[#allocation2 + $0x10] sm:$0xff]
        %v302 = vld [vmem:[#allocation2 + $0x18] sm:$0xff]
        %v303 = vld [vmem:[%s3] sm:$0x1]
        %v305 = vperm.slane %v303, 0
        %vm307 = vcmask 261120
        %v309 = vsel %vm307, %v298, 0
        %311 = vmatpush.msra.mxu0 0.0
        %312 = vmatpush.msra.mxu0 0.0
        %313 = vmatpush.msra.mxu0 0.0
        %314 = vmatpush.msra.mxu0 0.0
        %315 = vmatpush.msra.mxu0 0.0
        %316 = vmatpush.msra.mxu0 0.0
        %317 = vmatpush.msra.mxu0 0.0
        %318 = vmatpush.msra.mxu0 0.0
        %319 = vmatpush.msra.mxu0 0.0
        %320 = vmatpush.msra.mxu0 0.0
        %321 = vmatpush.msra.mxu0 0.0
        %322 = vmatpush.msra.mxu0 0.0
        %323 = vmatpush.msra.mxu0 %v302
        %324 = vmatpush.msra.mxu0 %v301
        %325 = vmatpush.msra.mxu0 %v300
        %326 = vmatpush.msra.mxu0 %v299
        %327 = vmatmul.f32.gmra.mxu0 %v309
        %v328 = vpop.f32.mrf.mxu0
        %v329 = vadd.f32 %v305, %v328
        %330 = vdwg.mxu0
        %v331 = vld [vmem:[#allocation5] sm:$0xff]
        %v332 = vld [vmem:[#allocation5 + $0x8] sm:$0xff]
        %v333 = vld [vmem:[#allocation5 + $0x10] sm:$0xff]
        %v334 = vld [vmem:[#allocation5 + $0x18] sm:$0xff]
        %v335 = vld [vmem:[%s5] sm:$0x1]
        %v337 = vperm.slane %v335, 0
        %339 = vmatpush.msra.mxu0 0.0
        %340 = vmatpush.msra.mxu0 0.0
        %341 = vmatpush.msra.mxu0 0.0
        %342 = vmatpush.msra.mxu0 0.0
        %343 = vmatpush.msra.mxu0 0.0
        %344 = vmatpush.msra.mxu0 0.0
        %345 = vmatpush.msra.mxu0 0.0
        %346 = vmatpush.msra.mxu0 0.0
        %347 = vmatpush.msra.mxu0 0.0
        %348 = vmatpush.msra.mxu0 0.0
        %349 = vmatpush.msra.mxu0 0.0
        %350 = vmatpush.msra.mxu0 0.0
        %351 = vmatpush.msra.mxu0 %v334
        %352 = vmatpush.msra.mxu0 %v333
        %353 = vmatpush.msra.mxu0 %v332
        %354 = vmatpush.msra.mxu0 %v331
        %355 = vmatmul.f32.gmra.mxu0 %v309
        %v356 = vpop.f32.mrf.mxu0
        %v357 = vadd.f32 %v337, %v356
        %358 = vdwg.mxu0
        %v359 = vxor.u32 %v329, 2147483648
        %v360 = vmul.f32 %v359, 1.442695
        %v361 = vpow.pop %v360
        %v362 = vadd.f32 %v361, 1.0
        %v363 = vrcp.pop %v362
        %v364 = vmul.f32 %v362, %v363
        %v365 = vsub.f32 1.0, %v364
        %v366 = vmul.f32 %v363, %v365
        %v367 = vadd.f32 %v363, %v366
        %vm368 = vweird.f32 %v362
        %vm369 = vweird.f32 %v363
        %vm370 = vmor %vm368, %vm369
        %v371 = vsel %vm370, %v363, %v367
        %v372 = vand.u32 2147483647, %v362
        %vm373 = vcmp.eq.f32.partialorder %v372, 8.507059e+37
        %v374 = vand.u32 %v362, 2147483648
        %v375 = vor.u32 1.1754944e-38, %v374
        %v376 = vsel %vm373, %v375, %v371
        %v377 = vmul.f32 1.0, %v376
        %v378 = vtanh.pop %v357
        %v379 = vld [vmem:[%s297] sm:$0xff]
        %381 = vset.pattern.permute.xlu0 0
        %382 = vperm.xlu0 %381, %v379
        %v383 = vpop.permute.xlu0 %382
        %v385 = vmul.f32 %v377, %v298
        %v386 = vsub.f32 %v378, %v385
        %v387 = vmul.f32 %v383, %v386
        %v388 = vadd.f32 %v298, %v387
        %389 = vst.msk [vmem:[%s289] sm:$0xff] %vm307, %v388
        %s390 = sand.u32 %s166, 1
        %s391 = scalar_lea.sflag [#allocation4], %s390
        %s392 = sand.u32 %s166, 1
        %s393 = smul.addr %s392, 8
        %s394 = scalar_lea.vmem [#allocation7], %s393
        // Predicated region
        $region53: #{erase_add_gate_prepared.1} parent=43 // pred_check
          %p395 = pneg %p176
        $region54: #{erase_add_gate_prepared.1} parent=43 // pred_check_branch
          %397 = sbr.rel (%p395) target = $region56
        $region55: #{erase_add_gate_prepared.1} parent=43 // pred_region
          %399 = vsyncadd %s391, 0
          %s400 = smul.addr %s22, 8
          %s401 = scalar_lea.hbm %s6, %s400
          %s403 = sshll.u32 %s394, 4
          %s404 = int_to_ptr.vmem [resolvable:$true] %s403
          %s405 = sshll.u32 %s401, 4
          %s406 = int_to_ptr.hbm [resolvable:$true] %s405
          %408 = dma.vmem_to_hbm [thread:$0]  %s404, 128, %s406, %s391
        $region56: #{erase_add_gate_prepared.1} parent=43 // pred_fallthru
          _
      $region44: #{erase_add_gate_prepared.1} parent=5 // pred_fallthru
        _
      %p409 = scmp.le.s32.totalorder 2, %s17
      // Predicated region
      $region57: #{erase_add_gate_prepared.1} parent=5 // pred_check
        %p410 = pneg %p409
      $region58: #{erase_add_gate_prepared.1} parent=5 // pred_check_branch
        %412 = sbr.rel (%p410) target = $region60
      $region59: #{erase_add_gate_prepared.1} parent=5 // pred_region
        %s413 = ssub.s32 %s17, 2
        // Predicated region
        $region61: #{erase_add_gate_prepared.1} parent=59 // pred_check
          %p414 = pneg %p182
        $region62: #{erase_add_gate_prepared.1} parent=59 // pred_check_branch
          %416 = sbr.rel (%p414) target = $region64
        $region63: #{erase_add_gate_prepared.1} parent=59 // pred_region
          %s417 = sand.u32 %s167, 1
          %s418 = scalar_lea.sflag [#allocation4], %s417
          %s419 = sand.u32 %s167, 1
          %s420 = smul.addr %s419, 8
          %s421 = scalar_lea.vmem [#allocation7], %s420
          %423 = dma.done %s418, 128
        $region64: #{erase_add_gate_prepared.1} parent=59 // pred_fallthru
          _
      $region60: #{erase_add_gate_prepared.1} parent=5 // pred_fallthru
        _
    $region6: #{erase_add_gate_prepared.1} parent=1 // loop_footer
      %s21 = sadd.s32 1, %s17
    $region7: #{erase_add_gate_prepared.1} parent=1 // loop_footer_branch
      %16 = sbr.rel target = $region3
    $region8: #{erase_add_gate_prepared.1} parent=1 // loop_exit
      _
    %424 = vsyncpa [#allocation3], 1
    %s425 = scalar_lea.sflag [#allocation3], 1
    %426 = vsyncpa %s425, 1
    %427 = vsyncpa [#allocation6], 1
    %428 = vsyncpa [#allocation4], 1
    %s429 = scalar_lea.sflag [#allocation4], 1
    %430 = vsyncpa %s429, 1

</llo_original>
